<compile_context>
chip_gen: v7x
topology: tpu7x:2x2x1
jax: 0.10.0
libtpu: 0.0.40
codegen_flags: <defaults>
</compile_context>

<pallas_src>
import functools

import jax
import jax.numpy as jnp
from jax.experimental import pallas as pl
from jax.experimental.pallas import tpu as pltpu


def _round_up(x, m):
    return ((x + m - 1) // m) * m


def actor_kernel(x_ref, w1_ref, w23_ref, w4_ref, b_ref, out_ref):
    h1 = w1_ref.shape[1]        # hidden width (static)
    a_dim = w4_ref.shape[1]     # action_dim   (static)

    # Hoist the tiny, grid-invariant parameters into locals once per step.
    w1 = w1_ref[...]
    w2 = w23_ref[0]
    w3 = w23_ref[1]
    w4 = w4_ref[...]
    b = b_ref[...]
    b1 = b[0:1, :h1]
    b2 = b[1:2, :h1]
    b3 = b[2:3, :h1]
    b4 = b[3:4, :a_dim]

    x = x_ref[...]
    # Layer 1: Linear + ReLU
    h = jnp.maximum(jnp.dot(x, w1, preferred_element_type=jnp.float32) + b1, 0.0)
    # Layer 2: Linear + ReLU
    h = jnp.maximum(jnp.dot(h, w2, preferred_element_type=jnp.float32) + b2, 0.0)
    # Layer 3: Linear + ReLU
    h = jnp.maximum(jnp.dot(h, w3, preferred_element_type=jnp.float32) + b3, 0.0)
    # Layer 4: Linear (no activation)
    h = jnp.dot(h, w4, preferred_element_type=jnp.float32) + b4
    out_ref[...] = h.astype(out_ref.dtype)


def pack_actor_params(params):
    """Pack per-layer params into fewer, DMA-friendly operands (one-time)."""
    h1 = params["w1"].shape[1]
    a_dim = params["w4"].shape[1]
    bmax = max(h1, a_dim)

    def pad_bias(b):
        return jnp.pad(b, ((0, 0), (0, bmax - b.shape[1])))

    return {
        "w1": params["w1"],                                       # (n_states, H)
        "w23": jnp.stack([params["w2"], params["w3"]], axis=0),   # (2, H, H)
        "w4": params["w4"],                                       # (H, A)
        "b": jnp.concatenate(
            [pad_bias(params["b1"]), pad_bias(params["b2"]),
             pad_bias(params["b3"]), pad_bias(params["b4"])], axis=0),  # (4, bmax)
    }


@functools.partial(jax.jit, static_argnames=("tile_b",))
def actor_forward(state, packed, *, tile_b=512):
    """state: (B, n_states) float32; packed: output of pack_actor_params."""
    B, n_states = state.shape
    w1, w23, w4, b = packed["w1"], packed["w23"], packed["w4"], packed["b"]
    h1 = w1.shape[1]
    a_dim = w4.shape[1]
    bmax = b.shape[1]

    # Batch tile: big enough to amortize per-step pipeline overhead, small
    # enough that the double-buffered, 128-lane-padded f32 tiles stay far
    # below the scoped VMEM limit.  Small batches shrink the tile rather
    # than padding all the way up to the default.
    tile_b = min(tile_b, _round_up(B, 8))
    B_pad = _round_up(B, tile_b)
    if B_pad != B:
        state = jnp.pad(state, ((0, B_pad - B), (0, 0)))

    grid = (pl.cdiv(B_pad, tile_b),)
    out = pl.pallas_call(
        actor_kernel,
        out_shape=jax.ShapeDtypeStruct((B_pad, a_dim), jnp.float32),
        grid=grid,
        in_specs=[
            # Activations: tiled on rows -> pipelined HBM->VMEM DMA.
            pl.BlockSpec((tile_b, n_states), lambda i: (i, 0)),
            # Parameters: constant index_map -> resident in VMEM, DMA'd once.
            pl.BlockSpec((n_states, h1), lambda i: (0, 0)),
            pl.BlockSpec((2, h1, h1), lambda i: (0, 0, 0)),
            pl.BlockSpec((h1, a_dim), lambda i: (0, 0)),
            pl.BlockSpec((4, bmax), lambda i: (0, 0)),
        ],
        out_specs=pl.BlockSpec((tile_b, a_dim), lambda i: (i, 0)),
        compiler_params=pltpu.CompilerParams(
            dimension_semantics=("parallel",)),
    )(state, w1, w23, w4, b)
    return out[:B] if B_pad != B else out


def init_actor_params(key, n_states, action_dim, hidden1):
    """Deterministic init mimicking PyTorch nn.Linear default (U[-1/sqrt(fan_in), +])."""
    dims = [(n_states, hidden1), (hidden1, hidden1),
            (hidden1, hidden1), (hidden1, action_dim)]
    params = {}
    for idx, (fan_in, fan_out) in enumerate(dims, start=1):
        key, kw, kb = jax.random.split(key, 3)
        bound = 1.0 / jnp.sqrt(jnp.float32(fan_in))
        # Stored as (in, out) == PyTorch weight.T
        params[f"w{idx}"] = jax.random.uniform(
            kw, (fan_in, fan_out), jnp.float32, -bound, bound)
        params[f"b{idx}"] = jax.random.uniform(
            kb, (1, fan_out), jnp.float32, -bound, bound)
    return params


def actor_forward_ref(state, params):
    """Pure-JAX reference for correctness checking."""
    h = jnp.maximum(state @ params["w1"] + params["b1"], 0.0)
    h = jnp.maximum(h @ params["w2"] + params["b2"], 0.0)
    h = jnp.maximum(h @ params["w3"] + params["b3"], 0.0)
    return h @ params["w4"] + params["b4"]


if __name__ == "__main__":
    key = jax.random.PRNGKey(0)
    n_states, action_dim, hidden1 = 24, 4, 20

    params = init_actor_params(key, n_states, action_dim, hidden1)
    packed = pack_actor_params(params)

    # Small-batch check (single grid step).
    key, k_state = jax.random.split(key)
    batch = 8
    state = jax.random.normal(k_state, (batch, n_states), jnp.float32)
    out = jax.block_until_ready(actor_forward(state, packed))
    ref = actor_forward_ref(state, params)
    assert out.shape == (batch, action_dim)
    assert jnp.allclose(out, ref, atol=1e-5, rtol=1e-5)

    # Larger ragged batch: exercises the batch grid, pipelining and padding.
    key, k_big = jax.random.split(key)
    big_batch = 1000
    big_state = jax.random.normal(k_big, (big_batch, n_states), jnp.float32)
    big_out = jax.block_until_ready(actor_forward(big_state, packed))
    big_ref = actor_forward_ref(big_state, params)
    assert big_out.shape == (big_batch, action_dim)
    assert jnp.allclose(big_out, big_ref, atol=1e-5, rtol=1e-5)

    print("KERNEL_OK")
</pallas_src>

<mosaic_0001>
module attributes {stable_mosaic.version = 11 : i64} {
  func.func @actor_kernel(%arg0: i32, %arg1: memref<8x24xf32, #tpu.memory_space<vmem>>, %arg2: memref<24x20xf32, #tpu.memory_space<vmem>>, %arg3: memref<2x20x20xf32, #tpu.memory_space<vmem>>, %arg4: memref<20x4xf32, #tpu.memory_space<vmem>>, %arg5: memref<4x20xf32, #tpu.memory_space<vmem>>, %arg6: memref<8x4xf32, #tpu.memory_space<vmem>>) attributes {dimension_semantics = [#tpu.dimension_semantics<parallel>], iteration_bounds = array<i64: 1>, scalar_prefetch = 0 : i64, scratch_operands = 0 : i64, tpu.core_type = #tpu.core_type<tc>, window_params = [{transform_indices = @transform_0, window_bounds = array<i64: 8, 24>}, {pipeline_mode = #tpu.pipeline_mode<synchronous>, transform_indices = @transform_1, window_bounds = array<i64: 24, 20>}, {pipeline_mode = #tpu.pipeline_mode<synchronous>, transform_indices = @transform_2, window_bounds = array<i64: 2, 20, 20>}, {pipeline_mode = #tpu.pipeline_mode<synchronous>, transform_indices = @transform_3, window_bounds = array<i64: 20, 4>}, {pipeline_mode = #tpu.pipeline_mode<synchronous>, transform_indices = @transform_4, window_bounds = array<i64: 4, 20>}, {transform_indices = @transform_5, window_bounds = array<i64: 8, 4>}]} {
    %c0 = arith.constant 0 : index
    %c0_0 = arith.constant 0 : index
    %0 = vector.load %arg2[%c0, %c0_0] : memref<24x20xf32, #tpu.memory_space<vmem>>, vector<24x20xf32>
    %c0_1 = arith.constant 0 : index
    %c0_2 = arith.constant 0 : index
    %c0_3 = arith.constant 0 : index
    %1 = vector.load %arg3[%c0_1, %c0_2, %c0_3] : memref<2x20x20xf32, #tpu.memory_space<vmem>>, vector<1x20x20xf32>
    %2 = vector.shape_cast %1 : vector<1x20x20xf32> to vector<20x20xf32>
    %c1 = arith.constant 1 : index
    %c0_4 = arith.constant 0 : index
    %c0_5 = arith.constant 0 : index
    %3 = vector.load %arg3[%c1, %c0_4, %c0_5] : memref<2x20x20xf32, #tpu.memory_space<vmem>>, vector<1x20x20xf32>
    %4 = vector.shape_cast %3 : vector<1x20x20xf32> to vector<20x20xf32>
    %c0_6 = arith.constant 0 : index
    %c0_7 = arith.constant 0 : index
    %5 = vector.load %arg4[%c0_6, %c0_7] : memref<20x4xf32, #tpu.memory_space<vmem>>, vector<20x4xf32>
    %c0_8 = arith.constant 0 : index
    %c0_9 = arith.constant 0 : index
    %6 = vector.load %arg5[%c0_8, %c0_9] : memref<4x20xf32, #tpu.memory_space<vmem>>, vector<4x20xf32>
    %7 = vector.extract_strided_slice %6 {offsets = [0, 0], sizes = [1, 20], strides = [1, 1]} : vector<4x20xf32> to vector<1x20xf32>
    %8 = vector.extract_strided_slice %6 {offsets = [1, 0], sizes = [1, 20], strides = [1, 1]} : vector<4x20xf32> to vector<1x20xf32>
    %9 = vector.extract_strided_slice %6 {offsets = [2, 0], sizes = [1, 20], strides = [1, 1]} : vector<4x20xf32> to vector<1x20xf32>
    %10 = vector.extract_strided_slice %6 {offsets = [3, 0], sizes = [1, 4], strides = [1, 1]} : vector<4x20xf32> to vector<1x4xf32>
    %c0_10 = arith.constant 0 : index
    %c0_11 = arith.constant 0 : index
    %11 = vector.load %arg1[%c0_10, %c0_11] : memref<8x24xf32, #tpu.memory_space<vmem>>, vector<8x24xf32>
    %cst = arith.constant dense<0.000000e+00> : vector<8x20xf32>
    %12 = tpu.matmul %11, %0, %cst {dimension_numbers = #tpu.dot_dimension_numbers<[1], [0], [0], [1], [0, 0, 1, 1], [], []>} : vector<8x24xf32>, vector<24x20xf32>, vector<8x20xf32> -> vector<8x20xf32>
    %13 = vector.broadcast %7 : vector<1x20xf32> to vector<8x20xf32>
    %14 = arith.addf %12, %13 : vector<8x20xf32>
    %cst_12 = arith.constant 0.000000e+00 : f32
    %15 = vector.broadcast %cst_12 : f32 to vector<8x20xf32>
    %16 = arith.maximumf %14, %15 : vector<8x20xf32>
    %cst_13 = arith.constant dense<0.000000e+00> : vector<8x20xf32>
    %17 = tpu.matmul %16, %2, %cst_13 {dimension_numbers = #tpu.dot_dimension_numbers<[1], [0], [0], [1], [0, 0, 1, 1], [], []>} : vector<8x20xf32>, vector<20x20xf32>, vector<8x20xf32> -> vector<8x20xf32>
    %18 = vector.broadcast %8 : vector<1x20xf32> to vector<8x20xf32>
    %19 = arith.addf %17, %18 : vector<8x20xf32>
    %cst_14 = arith.constant 0.000000e+00 : f32
    %20 = vector.broadcast %cst_14 : f32 to vector<8x20xf32>
    %21 = arith.maximumf %19, %20 : vector<8x20xf32>
    %cst_15 = arith.constant dense<0.000000e+00> : vector<8x20xf32>
    %22 = tpu.matmul %21, %4, %cst_15 {dimension_numbers = #tpu.dot_dimension_numbers<[1], [0], [0], [1], [0, 0, 1, 1], [], []>} : vector<8x20xf32>, vector<20x20xf32>, vector<8x20xf32> -> vector<8x20xf32>
    %23 = vector.broadcast %9 : vector<1x20xf32> to vector<8x20xf32>
    %24 = arith.addf %22, %23 : vector<8x20xf32>
    %cst_16 = arith.constant 0.000000e+00 : f32
    %25 = vector.broadcast %cst_16 : f32 to vector<8x20xf32>
    %26 = arith.maximumf %24, %25 : vector<8x20xf32>
    %cst_17 = arith.constant dense<0.000000e+00> : vector<8x4xf32>
    %27 = tpu.matmul %26, %5, %cst_17 {dimension_numbers = #tpu.dot_dimension_numbers<[1], [0], [0], [1], [0, 0, 1, 1], [], []>} : vector<8x20xf32>, vector<20x4xf32>, vector<8x4xf32> -> vector<8x4xf32>
    %28 = vector.broadcast %10 : vector<1x4xf32> to vector<8x4xf32>
    %29 = arith.addf %27, %28 : vector<8x4xf32>
    %c0_18 = arith.constant 0 : index
    %c0_19 = arith.constant 0 : index
    %30 = vector.load %arg6[%c0_18, %c0_19] : memref<8x4xf32, #tpu.memory_space<vmem>>, vector<8x4xf32>
    tpu.vector_store %arg6[%c0_18, %c0_19], %29 {strides = array<i32>} : memref<8x4xf32, #tpu.memory_space<vmem>>, vector<8x4xf32>,
    return
  }
  func.func @transform_0(%arg0: i32) -> (i32, i32) {
    %c0_i32 = arith.constant 0 : i32
    %c0_i32_0 = arith.constant 0 : i32
    return %arg0, %c0_i32 : i32, i32
  }
  func.func @transform_1(%arg0: i32) -> (i32, i32) {
    %c0_i32 = arith.constant 0 : i32
    %c0_i32_0 = arith.constant 0 : i32
    %c0_i32_1 = arith.constant 0 : i32
    return %c0_i32, %c0_i32_0 : i32, i32
  }
  func.func @transform_2(%arg0: i32) -> (i32, i32, i32) {
    %c0_i32 = arith.constant 0 : i32
    %c0_i32_0 = arith.constant 0 : i32
    %c0_i32_1 = arith.constant 0 : i32
    %c0_i32_2 = arith.constant 0 : i32
    return %c0_i32, %c0_i32_0, %c0_i32_1 : i32, i32, i32
  }
  func.func @transform_3(%arg0: i32) -> (i32, i32) {
    %c0_i32 = arith.constant 0 : i32
    %c0_i32_0 = arith.constant 0 : i32
    %c0_i32_1 = arith.constant 0 : i32
    return %c0_i32, %c0_i32_0 : i32, i32
  }
  func.func @transform_4(%arg0: i32) -> (i32, i32) {
    %c0_i32 = arith.constant 0 : i32
    %c0_i32_0 = arith.constant 0 : i32
    %c0_i32_1 = arith.constant 0 : i32
    return %c0_i32, %c0_i32_0 : i32, i32
  }
  func.func @transform_5(%arg0: i32) -> (i32, i32) {
    %c0_i32 = arith.constant 0 : i32
    %c0_i32_0 = arith.constant 0 : i32
    return %arg0, %c0_i32 : i32, i32
  }
}

</mosaic_0001>

<llo_original>
// kernel: actor_forward.1
$region0: #{actor_forward.1}
  #allocation0 [shape = 'u32[]', space=smem, size = 0x4, offset = 0x4, fixed_abs, tag = 'smem constant byte address 0x4 - core index']
  #allocation1 [shape = 'u32[144,128]{1,0:T(1,128)}', space=vmem, size = 0x12000, scoped, tag = 'internal scratch']
  %s0 = inlined_call_operand.vmem [shape: f32[8,24], index: 0, kind: input, shape index: {}]
  %s1 = inlined_call_operand.vmem [shape: f32[24,20], index: 1, kind: input, shape index: {}]
  %s2 = inlined_call_operand.vmem [shape: f32[2,20,20], index: 2, kind: input, shape index: {}]
  %s3 = inlined_call_operand.vmem [shape: f32[20,4], index: 3, kind: input, shape index: {}]
  %s4 = inlined_call_operand.vmem [shape: f32[4,20], index: 4, kind: input, shape index: {}]
  %s5 = inlined_call_operand.vmem [shape: f32[8,4], index: 5, kind: output, shape index: {}]
  %s6 = sld [smem:[#allocation0]]
  $region30: #{actor_forward.1} parent=0
    _
  %s8 = ssub.s32 1, %s6
  %s9 = scalar_select 0, %s8, %s6
  // Predicated region
  $region2: #{actor_forward.1} parent=0 // pred_check
    _
  $region3: #{actor_forward.1} parent=0 // pred_check_branch
    %11 = sbr.rel (0) target = $region5
  $region4: #{actor_forward.1} parent=0 // pred_region
    _
  $region5: #{actor_forward.1} parent=0 // pred_fallthru
    _
  // Predicated region
  $region6: #{actor_forward.1} parent=0 // pred_check
    _
  $region7: #{actor_forward.1} parent=0 // pred_check_branch
    %13 = sbr.rel (0) target = $region9
  $region8: #{actor_forward.1} parent=0 // pred_region
    _
  $region9: #{actor_forward.1} parent=0 // pred_fallthru
    _
  // Predicated region
  $region10: #{actor_forward.1} parent=0 // pred_check
    _
  $region11: #{actor_forward.1} parent=0 // pred_check_branch
    %15 = sbr.rel (0) target = $region13
  $region12: #{actor_forward.1} parent=0 // pred_region
    _
  $region13: #{actor_forward.1} parent=0 // pred_fallthru
    _
  // Predicated region
  $region14: #{actor_forward.1} parent=0 // pred_check
    _
  $region15: #{actor_forward.1} parent=0 // pred_check_branch
    %17 = sbr.rel (0) target = $region17
  $region16: #{actor_forward.1} parent=0 // pred_region
    _
  $region17: #{actor_forward.1} parent=0 // pred_fallthru
    _
  // Predicated region
  $region18: #{actor_forward.1} parent=0 // pred_check
    _
  $region19: #{actor_forward.1} parent=0 // pred_check_branch
    %19 = sbr.rel (0) target = $region21
  $region20: #{actor_forward.1} parent=0 // pred_region
    _
  $region21: #{actor_forward.1} parent=0 // pred_fallthru
    _
  %v20 = vld [vmem:[%s1] sm:$0xff]
  %v21 = vld [vmem:[%s1 + $0x8] sm:$0xff]
  %v22 = vld [vmem:[%s1 + $0x10] sm:$0xff]
  %v23 = vld [vmem:[%s2] sm:$0xff]
  %v24 = vld [vmem:[%s2 + $0x8] sm:$0xff]
  %v25 = vld [vmem:[%s2 + $0x10] sm:$0xf]
  %s26 = scalar_lea.vmem %s2, 24
  %v27 = vld [vmem:[%s26] sm:$0xff]
  %v28 = vld [vmem:[%s26 + $0x8] sm:$0xff]
  %v29 = vld [vmem:[%s26 + $0x10] sm:$0xf]
  %v30 = vld [vmem:[%s3] sm:$0xff]
  %v31 = vld [vmem:[%s3 + $0x8] sm:$0xff]
  %v32 = vld [vmem:[%s3 + $0x10] sm:$0xf]
  %v33 = vld [vmem:[%s4] sm:$0xf]
  %v34 = vld [vmem:[%s0] sm:$0xff]
  %v35 = vlaneseq
  %v36 = vshrl.u32 %v35, 7
  %v37 = vsub.s32 0, %v36
  %v38 = vrot.slane %v33, %v37
  %vm39 = vcmask 195584
  %v41 = vsel %vm39, %v34, 0
  %43 = vmatprep.subr.mxu0 0.0
  %44 = vmatpush1.msra.mxu0 %v20
  %45 = vmatprep.subr.mxu0 0.0
  %46 = vmatpush1.msra.mxu0 %v21
  %47 = vmatprep.subr.mxu0 0.0
  %48 = vmatpush1.msra.mxu0 %v22
  %49 = vmatprep.subr.mxu0 0.0
  %50 = vmatpush1.msra.mxu0 0.0
  %51 = vmatprep.subr.mxu0 0.0
  %52 = vmatpush1.msra.mxu0 0.0
  %53 = vmatprep.subr.mxu0 0.0
  %54 = vmatpush1.msra.mxu0 0.0
  %55 = vmatprep.subr.mxu0 0.0
  %56 = vmatpush1.msra.mxu0 0.0
  %57 = vmatprep.subr.mxu0 0.0
  %58 = vmatpush1.msra.mxu0 0.0
  %59 = vmatprep.subr.mxu0 0.0
  %60 = vmatpush1.msra.mxu0 0.0
  %61 = vmatprep.subr.mxu0 0.0
  %62 = vmatpush1.msra.mxu0 0.0
  %63 = vmatprep.subr.mxu0 0.0
  %64 = vmatpush1.msra.mxu0 0.0
  %65 = vmatprep.subr.mxu0 0.0
  %66 = vmatpush1.msra.mxu0 0.0
  %67 = vmatprep.subr.mxu0 0.0
  %68 = vmatpush1.msra.mxu0 0.0
  %69 = vmatprep.subr.mxu0 0.0
  %70 = vmatpush1.msra.mxu0 0.0
  %71 = vmatprep.subr.mxu0 0.0
  %72 = vmatpush1.msra.mxu0 0.0
  %73 = vmatprep.subr.mxu0 0.0
  %74 = vmatpush1.msra.mxu0 0.0
  %75 = vmatprep.subr.mxu0 0.0
  %76 = vmatpush1.msra.mxu0 0.0
  %77 = vmatprep.subr.mxu0 0.0
  %78 = vmatpush1.msra.mxu0 0.0
  %79 = vmatprep.subr.mxu0 0.0
  %80 = vmatpush1.msra.mxu0 0.0
  %81 = vmatprep.subr.mxu0 0.0
  %82 = vmatpush1.msra.mxu0 0.0
  %83 = vmatprep.subr.mxu0 0.0
  %84 = vmatpush1.msra.mxu0 0.0
  %85 = vmatprep.subr.mxu0 0.0
  %86 = vmatpush1.msra.mxu0 0.0
  %87 = vmatprep.subr.mxu0 0.0
  %88 = vmatpush1.msra.mxu0 0.0
  %89 = vmatprep.subr.mxu0 0.0
  %90 = vmatpush1.msra.mxu0 0.0
  %91 = vmatprep.subr.mxu0 0.0
  %92 = vmatpush1.msra.mxu0 0.0
  %93 = vmatprep.subr.mxu0 0.0
  %94 = vmatpush1.msra.mxu0 0.0
  %95 = vmatprep.subr.mxu0 0.0
  %96 = vmatpush1.msra.mxu0 0.0
  %97 = vmatprep.subr.mxu0 0.0
  %98 = vmatpush1.msra.mxu0 0.0
  %99 = vmatprep.subr.mxu0 0.0
  %100 = vmatpush1.msra.mxu0 0.0
  %101 = vmatprep.subr.mxu0 0.0
  %102 = vmatpush1.msra.mxu0 0.0
  %103 = vmatprep.subr.mxu0 0.0
  %104 = vmatpush1.msra.mxu0 0.0
  %105 = vmatprep.subr.mxu0 0.0
  %106 = vmatpush1.msra.mxu0 0.0
  %107 = vmatprep.mubr.f32.mxu0 0.0
  %108 = vmatmul.mubr.f32.gmra.mrb[0].mxu0 %v41
  %v109 = vpop.f32.mrb[0].mxu0
  %v110 = vadd.f32 %v38, %v109
  %v111 = vpop.f32.mrb[0].mxu0
  %112 = vdwg.mxu0
  %v113 = vmax.f32 %v110, 0.0
  %v114 = vlaneseq
  %v115 = vshrl.u32 %v114, 7
  %v116 = vsub.s32 1, %v115
  %v117 = vrot.slane %v33, %v116
  %vm118 = vcmask 162816
  %v120 = vsel %vm118, %v113, 0
  %vm122 = vcmask 1043456
  %v124 = vsel %vm122, %v25, 0
  %126 = vmatprep.subr.mxu0 0.0
  %127 = vmatpush1.msra.mxu0 %v23
  %128 = vmatprep.subr.mxu0 0.0
  %129 = vmatpush1.msra.mxu0 %v24
  %130 = vmatprep.subr.mxu0 0.0
  %131 = vmatpush1.msra.mxu0 %v124
  %132 = vmatprep.subr.mxu0 0.0
  %133 = vmatpush1.msra.mxu0 0.0
  %134 = vmatprep.subr.mxu0 0.0
  %135 = vmatpush1.msra.mxu0 0.0
  %136 = vmatprep.subr.mxu0 0.0
  %137 = vmatpush1.msra.mxu0 0.0
  %138 = vmatprep.subr.mxu0 0.0
  %139 = vmatpush1.msra.mxu0 0.0
  %140 = vmatprep.subr.mxu0 0.0
  %141 = vmatpush1.msra.mxu0 0.0
  %142 = vmatprep.subr.mxu0 0.0
  %143 = vmatpush1.msra.mxu0 0.0
  %144 = vmatprep.subr.mxu0 0.0
  %145 = vmatpush1.msra.mxu0 0.0
  %146 = vmatprep.subr.mxu0 0.0
  %147 = vmatpush1.msra.mxu0 0.0
  %148 = vmatprep.subr.mxu0 0.0
  %149 = vmatpush1.msra.mxu0 0.0
  %150 = vmatprep.subr.mxu0 0.0
  %151 = vmatpush1.msra.mxu0 0.0
  %152 = vmatprep.subr.mxu0 0.0
  %153 = vmatpush1.msra.mxu0 0.0
  %154 = vmatprep.subr.mxu0 0.0
  %155 = vmatpush1.msra.mxu0 0.0
  %156 = vmatprep.subr.mxu0 0.0
  %157 = vmatpush1.msra.mxu0 0.0
  %158 = vmatprep.subr.mxu0 0.0
  %159 = vmatpush1.msra.mxu0 0.0
  %160 = vmatprep.subr.mxu0 0.0
  %161 = vmatpush1.msra.mxu0 0.0
  %162 = vmatprep.subr.mxu0 0.0
  %163 = vmatpush1.msra.mxu0 0.0
  %164 = vmatprep.subr.mxu0 0.0
  %165 = vmatpush1.msra.mxu0 0.0
  %166 = vmatprep.subr.mxu0 0.0
  %167 = vmatpush1.msra.mxu0 0.0
  %168 = vmatprep.subr.mxu0 0.0
  %169 = vmatpush1.msra.mxu0 0.0
  %170 = vmatprep.subr.mxu0 0.0
  %171 = vmatpush1.msra.mxu0 0.0
  %172 = vmatprep.subr.mxu0 0.0
  %173 = vmatpush1.msra.mxu0 0.0
  %174 = vmatprep.subr.mxu0 0.0
  %175 = vmatpush1.msra.mxu0 0.0
  %176 = vmatprep.subr.mxu0 0.0
  %177 = vmatpush1.msra.mxu0 0.0
  %178 = vmatprep.subr.mxu0 0.0
  %179 = vmatpush1.msra.mxu0 0.0
  %180 = vmatprep.subr.mxu0 0.0
  %181 = vmatpush1.msra.mxu0 0.0
  %182 = vmatprep.subr.mxu0 0.0
  %183 = vmatpush1.msra.mxu0 0.0
  %184 = vmatprep.subr.mxu0 0.0
  %185 = vmatpush1.msra.mxu0 0.0
  %186 = vmatprep.subr.mxu0 0.0
  %187 = vmatpush1.msra.mxu0 0.0
  %188 = vmatprep.subr.mxu0 0.0
  %189 = vmatpush1.msra.mxu0 0.0
  %190 = vmatprep.mubr.f32.mxu0 0.0
  %191 = vmatmul.mubr.f32.gmra.mrb[0].mxu0 %v120
  %v192 = vpop.f32.mrb[0].mxu0
  %v193 = vadd.f32 %v117, %v192
  %v194 = vpop.f32.mrb[0].mxu0
  %195 = vdwg.mxu0
  %v196 = vmax.f32 %v193, 0.0
  %v197 = vlaneseq
  %v198 = vshrl.u32 %v197, 7
  %v199 = vsub.s32 2, %v198
  %v200 = vrot.slane %v33, %v199
  %v202 = vsel %vm118, %v196, 0
  %v205 = vsel %vm122, %v29, 0
  %207 = vmatprep.subr.mxu0 0.0
  %208 = vmatpush1.msra.mxu0 %v27
  %209 = vmatprep.subr.mxu0 0.0
  %210 = vmatpush1.msra.mxu0 %v28
  %211 = vmatprep.subr.mxu0 0.0
  %212 = vmatpush1.msra.mxu0 %v205
  %213 = vmatprep.subr.mxu0 0.0
  %214 = vmatpush1.msra.mxu0 0.0
  %215 = vmatprep.subr.mxu0 0.0
  %216 = vmatpush1.msra.mxu0 0.0
  %217 = vmatprep.subr.mxu0 0.0
  %218 = vmatpush1.msra.mxu0 0.0
  %219 = vmatprep.subr.mxu0 0.0
  %220 = vmatpush1.msra.mxu0 0.0
  %221 = vmatprep.subr.mxu0 0.0
  %222 = vmatpush1.msra.mxu0 0.0
  %223 = vmatprep.subr.mxu0 0.0
  %224 = vmatpush1.msra.mxu0 0.0
  %225 = vmatprep.subr.mxu0 0.0
  %226 = vmatpush1.msra.mxu0 0.0
  %227 = vmatprep.subr.mxu0 0.0
  %228 = vmatpush1.msra.mxu0 0.0
  %229 = vmatprep.subr.mxu0 0.0
  %230 = vmatpush1.msra.mxu0 0.0
  %231 = vmatprep.subr.mxu0 0.0
  %232 = vmatpush1.msra.mxu0 0.0
  %233 = vmatprep.subr.mxu0 0.0
  %234 = vmatpush1.msra.mxu0 0.0
  %235 = vmatprep.subr.mxu0 0.0
  %236 = vmatpush1.msra.mxu0 0.0
  %237 = vmatprep.subr.mxu0 0.0
  %238 = vmatpush1.msra.mxu0 0.0
  %239 = vmatprep.subr.mxu0 0.0
  %240 = vmatpush1.msra.mxu0 0.0
  %241 = vmatprep.subr.mxu0 0.0
  %242 = vmatpush1.msra.mxu0 0.0
  %243 = vmatprep.subr.mxu0 0.0
  %244 = vmatpush1.msra.mxu0 0.0
  %245 = vmatprep.subr.mxu0 0.0
  %246 = vmatpush1.msra.mxu0 0.0
  %247 = vmatprep.subr.mxu0 0.0
  %248 = vmatpush1.msra.mxu0 0.0
  %249 = vmatprep.subr.mxu0 0.0
  %250 = vmatpush1.msra.mxu0 0.0
  %251 = vmatprep.subr.mxu0 0.0
  %252 = vmatpush1.msra.mxu0 0.0
  %253 = vmatprep.subr.mxu0 0.0
  %254 = vmatpush1.msra.mxu0 0.0
  %255 = vmatprep.subr.mxu0 0.0
  %256 = vmatpush1.msra.mxu0 0.0
  %257 = vmatprep.subr.mxu0 0.0
  %258 = vmatpush1.msra.mxu0 0.0
  %259 = vmatprep.subr.mxu0 0.0
  %260 = vmatpush1.msra.mxu0 0.0
  %261 = vmatprep.subr.mxu0 0.0
  %262 = vmatpush1.msra.mxu0 0.0
  %263 = vmatprep.subr.mxu0 0.0
  %264 = vmatpush1.msra.mxu0 0.0
  %265 = vmatprep.subr.mxu0 0.0
  %266 = vmatpush1.msra.mxu0 0.0
  %267 = vmatprep.subr.mxu0 0.0
  %268 = vmatpush1.msra.mxu0 0.0
  %269 = vmatprep.subr.mxu0 0.0
  %270 = vmatpush1.msra.mxu0 0.0
  %271 = vmatprep.mubr.f32.mxu0 0.0
  %272 = vmatmul.mubr.f32.gmra.mrb[0].mxu0 %v202
  %v273 = vpop.f32.mrb[0].mxu0
  %v274 = vadd.f32 %v200, %v273
  %v275 = vpop.f32.mrb[0].mxu0
  %276 = vdwg.mxu0
  %v277 = vmax.f32 %v274, 0.0
  %v278 = vlaneseq
  %v279 = vshrl.u32 %v278, 7
  %v280 = vsub.s32 3, %v279
  %v281 = vrot.slane %v33, %v280
  %v283 = vsel %vm118, %v277, 0
  %v286 = vsel %vm122, %v32, 0
  %288 = vmatprep.subr.mxu0 0.0
  %289 = vmatpush1.msra.mxu0 %v30
  %290 = vmatprep.subr.mxu0 0.0
  %291 = vmatpush1.msra.mxu0 %v31
  %292 = vmatprep.subr.mxu0 0.0
  %293 = vmatpush1.msra.mxu0 %v286
  %294 = vmatprep.subr.mxu0 0.0
  %295 = vmatpush1.msra.mxu0 0.0
  %296 = vmatprep.subr.mxu0 0.0
  %297 = vmatpush1.msra.mxu0 0.0
  %298 = vmatprep.subr.mxu0 0.0
  %299 = vmatpush1.msra.mxu0 0.0
  %300 = vmatprep.subr.mxu0 0.0
  %301 = vmatpush1.msra.mxu0 0.0
  %302 = vmatprep.subr.mxu0 0.0
  %303 = vmatpush1.msra.mxu0 0.0
  %304 = vmatprep.subr.mxu0 0.0
  %305 = vmatpush1.msra.mxu0 0.0
  %306 = vmatprep.subr.mxu0 0.0
  %307 = vmatpush1.msra.mxu0 0.0
  %308 = vmatprep.subr.mxu0 0.0
  %309 = vmatpush1.msra.mxu0 0.0
  %310 = vmatprep.subr.mxu0 0.0
  %311 = vmatpush1.msra.mxu0 0.0
  %312 = vmatprep.subr.mxu0 0.0
  %313 = vmatpush1.msra.mxu0 0.0
  %314 = vmatprep.subr.mxu0 0.0
  %315 = vmatpush1.msra.mxu0 0.0
  %316 = vmatprep.subr.mxu0 0.0
  %317 = vmatpush1.msra.mxu0 0.0
  %318 = vmatprep.subr.mxu0 0.0
  %319 = vmatpush1.msra.mxu0 0.0
  %320 = vmatprep.subr.mxu0 0.0
  %321 = vmatpush1.msra.mxu0 0.0
  %322 = vmatprep.subr.mxu0 0.0
  %323 = vmatpush1.msra.mxu0 0.0
  %324 = vmatprep.subr.mxu0 0.0
  %325 = vmatpush1.msra.mxu0 0.0
  %326 = vmatprep.subr.mxu0 0.0
  %327 = vmatpush1.msra.mxu0 0.0
  %328 = vmatprep.subr.mxu0 0.0
  %329 = vmatpush1.msra.mxu0 0.0
  %330 = vmatprep.subr.mxu0 0.0
  %331 = vmatpush1.msra.mxu0 0.0
  %332 = vmatprep.subr.mxu0 0.0
  %333 = vmatpush1.msra.mxu0 0.0
  %334 = vmatprep.subr.mxu0 0.0
  %335 = vmatpush1.msra.mxu0 0.0
  %336 = vmatprep.subr.mxu0 0.0
  %337 = vmatpush1.msra.mxu0 0.0
  %338 = vmatprep.subr.mxu0 0.0
  %339 = vmatpush1.msra.mxu0 0.0
  %340 = vmatprep.subr.mxu0 0.0
  %341 = vmatpush1.msra.mxu0 0.0
  %342 = vmatprep.subr.mxu0 0.0
  %343 = vmatpush1.msra.mxu0 0.0
  %344 = vmatprep.subr.mxu0 0.0
  %345 = vmatpush1.msra.mxu0 0.0
  %346 = vmatprep.subr.mxu0 0.0
  %347 = vmatpush1.msra.mxu0 0.0
  %348 = vmatprep.subr.mxu0 0.0
  %349 = vmatpush1.msra.mxu0 0.0
  %350 = vmatprep.subr.mxu0 0.0
  %351 = vmatpush1.msra.mxu0 0.0
  %352 = vmatprep.mubr.f32.mxu0 0.0
  %353 = vmatmul.mubr.f32.gmra.mrb[0].mxu0 %v283
  %v354 = vpop.f32.mrb[0].mxu0
  %v355 = vadd.f32 %v281, %v354
  %v356 = vpop.f32.mrb[0].mxu0
  %357 = vdwg.mxu0
  %vm358 = vcmask 31744
  %359 = vst.msk [vmem:[%s5] sm:$0xff] %vm358, %v355
  // Predicated region
  $region22: #{actor_forward.1} parent=0 // pred_check
    _
  $region23: #{actor_forward.1} parent=0 // pred_check_branch
    %361 = sbr.rel (0) target = $region25
  $region24: #{actor_forward.1} parent=0 // pred_region
    _
  $region25: #{actor_forward.1} parent=0 // pred_fallthru
    _
  // Predicated region
  $region26: #{actor_forward.1} parent=0 // pred_check
    _
  $region27: #{actor_forward.1} parent=0 // pred_check_branch
    %363 = sbr.rel (0) target = $region29
  $region28: #{actor_forward.1} parent=0 // pred_region
    _
  $region29: #{actor_forward.1} parent=0 // pred_fallthru
    _

</llo_original>
